<compile_context>
chip_gen: v6e
topology: v6e:2x2x1
jax: 0.10.0
libtpu: 0.0.40
codegen_flags: <defaults>
</compile_context>

<pallas_src>
import jax
import jax.numpy as jnp
from jax import lax
from jax.experimental import pallas as pl
from jax.experimental.pallas import tpu as pltpu

_LANES = 128     # lane width (batch rides the lane axis)
_CS = 16         # sublanes per inner compute chunk (2 f32 vregs per slab)
_TG_CAP = 256    # max rows (of 128 lanes) per grid step -> 32K elems/step


def modelc_kernel(w1_ref, b1_ref, w2_ref, b2_ref, x_ref, lbl_ref, o_ref):
    # w1: (4,5) SMEM, b1: (5,) SMEM, w2: (5,3) SMEM, b2: (3,) SMEM
    # x:  (4, TG, 128) f32 VMEM, lbl: (TG, 128) i32 VMEM, o: (TG, 128) f32 VMEM
    # Hoist all 43 weight/bias scalars out of SMEM once (outside the chunk loop).
    w1 = [[w1_ref[k, j] for j in range(5)] for k in range(4)]
    b1 = [b1_ref[j] for j in range(5)]
    w2 = [[w2_ref[j, c] for c in range(3)] for j in range(5)]
    b2 = [b2_ref[c] for c in range(3)]

    tg = x_ref.shape[1]
    n_chunks = tg // _CS

    def chunk(c, carry):
        r0 = pl.multiple_of(c * _CS, _CS)
        x = x_ref[:, pl.ds(r0, _CS), :]                      # (4, CS, 128) f32

        # ---- dense1 + ELU(alpha=1): scalar-broadcast FMAs, VPU only ----
        h = []
        for j in range(5):
            acc = x[0] * w1[0][j] + b1[j]
            for k in range(1, 4):
                acc = acc + x[k] * w1[k][j]
            # clamp exp argument so the discarded branch stays finite
            h.append(jnp.where(acc > 0, acc,
                               jnp.exp(jnp.minimum(acc, 0.0)) - 1.0))

        # ---- dense2, unrolled ----
        z = []
        for cls in range(3):
            acc = h[0] * w2[0][cls] + b2[cls]
            for j in range(1, 5):
                acc = acc + h[j] * w2[j][cls]
            z.append(acc)

        # ---- softmax over the 3 class slabs (VPU max/add + EUP exp/recip, no XLU) ----
        m = jnp.maximum(jnp.maximum(z[0], z[1]), z[2])
        e0 = jnp.exp(z[0] - m)
        e1 = jnp.exp(z[1] - m)
        e2 = jnp.exp(z[2] - m)
        denom = e0 + e1 + e2
        inv = pl.reciprocal(denom, approx=True)              # EUP slot
        inv = inv * (2.0 - denom * inv)                      # one Newton step

        # ---- one-hot weighted sum == pick e_label (labels are int32 indices) ----
        lbl = lbl_ref[pl.ds(r0, _CS), :]                     # (CS, 128) i32
        picked = jnp.where(lbl == 0, e0, jnp.where(lbl == 1, e1, e2))
        o_ref[pl.ds(r0, _CS), :] = picked * inv              # lane-dense store
        return carry

    lax.fori_loop(0, n_chunks, chunk, 0, unroll=True)


def modelc_forward_blocked(x_blk, lbl_blk, params, *, tg):
    """x_blk: (4, rows_pad, 128) f32, lbl_blk: (rows_pad, 128) int32.
    Returns (rows_pad, 128) f32. rows_pad must be a multiple of tg (tg % _CS == 0)."""
    w1, b1, w2, b2 = params
    _, rows_pad, lanes = x_blk.shape
    assert lanes == _LANES and rows_pad % tg == 0 and tg % _CS == 0
    grid = rows_pad // tg

    n_elems = rows_pad * lanes
    cost = pl.CostEstimate(
        flops=110 * n_elems,
        transcendentals=9 * n_elems,
        bytes_accessed=(4 * 4 + 4 + 4) * n_elems,   # x(16B) + lbl(4B) + out(4B) per elem
    )

    return pl.pallas_call(
        modelc_kernel,
        out_shape=jax.ShapeDtypeStruct((rows_pad, lanes), jnp.float32),
        grid=(grid,),
        in_specs=[
            pl.BlockSpec(memory_space=pltpu.MemorySpace.SMEM),   # w1 (4,5)
            pl.BlockSpec(memory_space=pltpu.MemorySpace.SMEM),   # b1 (5,)
            pl.BlockSpec(memory_space=pltpu.MemorySpace.SMEM),   # w2 (5,3)
            pl.BlockSpec(memory_space=pltpu.MemorySpace.SMEM),   # b2 (3,)
            pl.BlockSpec((4, tg, lanes), lambda i: (0, i, 0)),   # x blocked
            pl.BlockSpec((tg, lanes), lambda i: (i, 0)),         # label indices
        ],
        out_specs=pl.BlockSpec((tg, lanes), lambda i: (i, 0)),
        compiler_params=pltpu.CompilerParams(
            dimension_semantics=("parallel",)),    # shard batch across TCs on v7x
        cost_estimate=cost,
    )(w1, b1, w2, b2, x_blk, lbl_blk)


def modelc_forward(x, l, params):
    """x: (N, ...) flattened from dim 1 to 4 features; l: (N, 3) one-hot labels.
    Returns (N,) = sum(softmax(dense2(elu(dense1(flatten(x))))) * l, axis=1)."""
    n = x.shape[0]
    xf = x.reshape(n, -1).astype(jnp.float32)                   # (N, 4)
    labels = jnp.argmax(l, axis=-1).astype(jnp.int32)           # l is one-hot -> index

    # Tile selection: rows of 128 lanes, blocks of up to _TG_CAP rows, and at
    # least 2 grid steps when there is enough work (v7x megacore).
    rows = pl.cdiv(n, _LANES)
    half = pl.cdiv(rows, 2)
    tg = max(_CS, min(_TG_CAP, pl.cdiv(half, _CS) * _CS))
    rows_pad = pl.cdiv(rows, tg) * tg
    n_pad = rows_pad * _LANES

    # Relayout to blocked feature-major (4, rows, 128) / (rows, 128).
    # TODO(synk): this transpose+pad is an extra HBM pass; produce inputs in the
    # blocked layout upstream and call modelc_forward_blocked directly when the
    # surrounding pipeline allows it.
    x_blk = (jnp.zeros((4, n_pad), jnp.float32)
             .at[:, :n].set(xf.T)
             .reshape(4, rows_pad, _LANES))
    lbl_blk = (jnp.zeros((n_pad,), jnp.int32)
               .at[:n].set(labels)
               .reshape(rows_pad, _LANES))

    out_blk = modelc_forward_blocked(x_blk, lbl_blk, params, tg=tg)
    return out_blk.reshape(-1)[:n]                              # (N,)


def make_params(key):
    """Deterministic init mimicking PyTorch Linear uniform(-1/sqrt(fan_in), +).
    Weights stored transposed (in, out) so the kernel computes x @ W + b."""
    k1, k2, k3, k4 = jax.random.split(key, 4)
    bound1 = 1.0 / jnp.sqrt(4.0)
    bound2 = 1.0 / jnp.sqrt(5.0)
    w1 = jax.random.uniform(k1, (4, 5), jnp.float32, -bound1, bound1)
    b1 = jax.random.uniform(k2, (5,), jnp.float32, -bound1, bound1)
    w2 = jax.random.uniform(k3, (5, 3), jnp.float32, -bound2, bound2)
    b2 = jax.random.uniform(k4, (3,), jnp.float32, -bound2, bound2)
    return w1, b1, w2, b2


def modelc_ref(x, l, params):
    w1, b1, w2, b2 = params
    xf = x.reshape(x.shape[0], -1).astype(jnp.float32)
    h = xf @ w1 + b1
    h = jnp.where(h > 0, h, jnp.exp(jnp.minimum(h, 0.0)) - 1.0)
    z = h @ w2 + b2
    p = jax.nn.softmax(z, axis=1)
    return jnp.sum(p * l.astype(jnp.float32), axis=1)


if __name__ == "__main__":
    key = jax.random.PRNGKey(0)
    kp, kx, kl, kx2, kl2 = jax.random.split(key, 5)

    params = make_params(kp)

    # Small inputs consistent with the spec: 100 samples, 4 features presented
    # as (N, 2, 2) and flattened from dim 1, one-hot labels over 3 classes.
    N = 100
    x = jax.random.uniform(kx, (N, 2, 2), jnp.float32)
    labels = jax.random.randint(kl, (N,), 0, 3)
    l = jax.nn.one_hot(labels, 3, dtype=jnp.float32)

    out = modelc_forward(x, l, params)
    out = jax.block_until_ready(out)
    ref = modelc_ref(x, l, params)
    assert out.shape == (N,)
    assert jnp.allclose(out, ref, atol=1e-4, rtol=1e-4)

    # Second check at a moderate batch to exercise multi-chunk / multi-step tiling.
    N2 = 40000
    x2 = jax.random.uniform(kx2, (N2, 2, 2), jnp.float32)
    labels2 = jax.random.randint(kl2, (N2,), 0, 3)
    l2 = jax.nn.one_hot(labels2, 3, dtype=jnp.float32)
    out2 = jax.block_until_ready(modelc_forward(x2, l2, params))
    ref2 = modelc_ref(x2, l2, params)
    assert out2.shape == (N2,)
    assert jnp.allclose(out2, ref2, atol=1e-4, rtol=1e-4)

    print("KERNEL_OK")
</pallas_src>

<mosaic_0001>
module attributes {stable_mosaic.version = 11 : i64} {
  func.func @modelc_kernel(%arg0: i32, %arg1: memref<4x5xf32, #tpu.memory_space<smem>>, %arg2: memref<5xf32, #tpu.memory_space<smem>>, %arg3: memref<5x3xf32, #tpu.memory_space<smem>>, %arg4: memref<3xf32, #tpu.memory_space<smem>>, %arg5: memref<4x16x128xf32, #tpu.memory_space<vmem>>, %arg6: memref<16x128xi32, #tpu.memory_space<vmem>>, %arg7: memref<16x128xf32, #tpu.memory_space<vmem>>) attributes {dimension_semantics = [#tpu.dimension_semantics<parallel>], iteration_bounds = array<i64: 1>, scalar_prefetch = 0 : i64, scratch_operands = 0 : i64, tpu.core_type = #tpu.core_type<tc>, window_params = [{transform_indices = @transform_0, window_bounds = array<i64: 4, 5>}, {transform_indices = @transform_1, window_bounds = array<i64: 5>}, {transform_indices = @transform_2, window_bounds = array<i64: 5, 3>}, {transform_indices = @transform_3, window_bounds = array<i64: 3>}, {transform_indices = @transform_4, window_bounds = array<i64: 4, 16, 128>}, {transform_indices = @transform_5, window_bounds = array<i64: 16, 128>}, {transform_indices = @transform_6, window_bounds = array<i64: 16, 128>}]} {
    %c0 = arith.constant 0 : index
    %c0_0 = arith.constant 0 : index
    %0 = memref.load %arg1[%c0, %c0_0] : memref<4x5xf32, #tpu.memory_space<smem>>
    %c0_1 = arith.constant 0 : index
    %c1 = arith.constant 1 : index
    %1 = memref.load %arg1[%c0_1, %c1] : memref<4x5xf32, #tpu.memory_space<smem>>
    %c0_2 = arith.constant 0 : index
    %c2 = arith.constant 2 : index
    %2 = memref.load %arg1[%c0_2, %c2] : memref<4x5xf32, #tpu.memory_space<smem>>
    %c0_3 = arith.constant 0 : index
    %c3 = arith.constant 3 : index
    %3 = memref.load %arg1[%c0_3, %c3] : memref<4x5xf32, #tpu.memory_space<smem>>
    %c0_4 = arith.constant 0 : index
    %c4 = arith.constant 4 : index
    %4 = memref.load %arg1[%c0_4, %c4] : memref<4x5xf32, #tpu.memory_space<smem>>
    %c1_5 = arith.constant 1 : index
    %c0_6 = arith.constant 0 : index
    %5 = memref.load %arg1[%c1_5, %c0_6] : memref<4x5xf32, #tpu.memory_space<smem>>
    %c1_7 = arith.constant 1 : index
    %c1_8 = arith.constant 1 : index
    %6 = memref.load %arg1[%c1_7, %c1_8] : memref<4x5xf32, #tpu.memory_space<smem>>
    %c1_9 = arith.constant 1 : index
    %c2_10 = arith.constant 2 : index
    %7 = memref.load %arg1[%c1_9, %c2_10] : memref<4x5xf32, #tpu.memory_space<smem>>
    %c1_11 = arith.constant 1 : index
    %c3_12 = arith.constant 3 : index
    %8 = memref.load %arg1[%c1_11, %c3_12] : memref<4x5xf32, #tpu.memory_space<smem>>
    %c1_13 = arith.constant 1 : index
    %c4_14 = arith.constant 4 : index
    %9 = memref.load %arg1[%c1_13, %c4_14] : memref<4x5xf32, #tpu.memory_space<smem>>
    %c2_15 = arith.constant 2 : index
    %c0_16 = arith.constant 0 : index
    %10 = memref.load %arg1[%c2_15, %c0_16] : memref<4x5xf32, #tpu.memory_space<smem>>
    %c2_17 = arith.constant 2 : index
    %c1_18 = arith.constant 1 : index
    %11 = memref.load %arg1[%c2_17, %c1_18] : memref<4x5xf32, #tpu.memory_space<smem>>
    %c2_19 = arith.constant 2 : index
    %c2_20 = arith.constant 2 : index
    %12 = memref.load %arg1[%c2_19, %c2_20] : memref<4x5xf32, #tpu.memory_space<smem>>
    %c2_21 = arith.constant 2 : index
    %c3_22 = arith.constant 3 : index
    %13 = memref.load %arg1[%c2_21, %c3_22] : memref<4x5xf32, #tpu.memory_space<smem>>
    %c2_23 = arith.constant 2 : index
    %c4_24 = arith.constant 4 : index
    %14 = memref.load %arg1[%c2_23, %c4_24] : memref<4x5xf32, #tpu.memory_space<smem>>
    %c3_25 = arith.constant 3 : index
    %c0_26 = arith.constant 0 : index
    %15 = memref.load %arg1[%c3_25, %c0_26] : memref<4x5xf32, #tpu.memory_space<smem>>
    %c3_27 = arith.constant 3 : index
    %c1_28 = arith.constant 1 : index
    %16 = memref.load %arg1[%c3_27, %c1_28] : memref<4x5xf32, #tpu.memory_space<smem>>
    %c3_29 = arith.constant 3 : index
    %c2_30 = arith.constant 2 : index
    %17 = memref.load %arg1[%c3_29, %c2_30] : memref<4x5xf32, #tpu.memory_space<smem>>
    %c3_31 = arith.constant 3 : index
    %c3_32 = arith.constant 3 : index
    %18 = memref.load %arg1[%c3_31, %c3_32] : memref<4x5xf32, #tpu.memory_space<smem>>
    %c3_33 = arith.constant 3 : index
    %c4_34 = arith.constant 4 : index
    %19 = memref.load %arg1[%c3_33, %c4_34] : memref<4x5xf32, #tpu.memory_space<smem>>
    %c0_35 = arith.constant 0 : index
    %20 = memref.load %arg2[%c0_35] : memref<5xf32, #tpu.memory_space<smem>>
    %c1_36 = arith.constant 1 : index
    %21 = memref.load %arg2[%c1_36] : memref<5xf32, #tpu.memory_space<smem>>
    %c2_37 = arith.constant 2 : index
    %22 = memref.load %arg2[%c2_37] : memref<5xf32, #tpu.memory_space<smem>>
    %c3_38 = arith.constant 3 : index
    %23 = memref.load %arg2[%c3_38] : memref<5xf32, #tpu.memory_space<smem>>
    %c4_39 = arith.constant 4 : index
    %24 = memref.load %arg2[%c4_39] : memref<5xf32, #tpu.memory_space<smem>>
    %c0_40 = arith.constant 0 : index
    %c0_41 = arith.constant 0 : index
    %25 = memref.load %arg3[%c0_40, %c0_41] : memref<5x3xf32, #tpu.memory_space<smem>>
    %c0_42 = arith.constant 0 : index
    %c1_43 = arith.constant 1 : index
    %26 = memref.load %arg3[%c0_42, %c1_43] : memref<5x3xf32, #tpu.memory_space<smem>>
    %c0_44 = arith.constant 0 : index
    %c2_45 = arith.constant 2 : index
    %27 = memref.load %arg3[%c0_44, %c2_45] : memref<5x3xf32, #tpu.memory_space<smem>>
    %c1_46 = arith.constant 1 : index
    %c0_47 = arith.constant 0 : index
    %28 = memref.load %arg3[%c1_46, %c0_47] : memref<5x3xf32, #tpu.memory_space<smem>>
    %c1_48 = arith.constant 1 : index
    %c1_49 = arith.constant 1 : index
    %29 = memref.load %arg3[%c1_48, %c1_49] : memref<5x3xf32, #tpu.memory_space<smem>>
    %c1_50 = arith.constant 1 : index
    %c2_51 = arith.constant 2 : index
    %30 = memref.load %arg3[%c1_50, %c2_51] : memref<5x3xf32, #tpu.memory_space<smem>>
    %c2_52 = arith.constant 2 : index
    %c0_53 = arith.constant 0 : index
    %31 = memref.load %arg3[%c2_52, %c0_53] : memref<5x3xf32, #tpu.memory_space<smem>>
    %c2_54 = arith.constant 2 : index
    %c1_55 = arith.constant 1 : index
    %32 = memref.load %arg3[%c2_54, %c1_55] : memref<5x3xf32, #tpu.memory_space<smem>>
    %c2_56 = arith.constant 2 : index
    %c2_57 = arith.constant 2 : index
    %33 = memref.load %arg3[%c2_56, %c2_57] : memref<5x3xf32, #tpu.memory_space<smem>>
    %c3_58 = arith.constant 3 : index
    %c0_59 = arith.constant 0 : index
    %34 = memref.load %arg3[%c3_58, %c0_59] : memref<5x3xf32, #tpu.memory_space<smem>>
    %c3_60 = arith.constant 3 : index
    %c1_61 = arith.constant 1 : index
    %35 = memref.load %arg3[%c3_60, %c1_61] : memref<5x3xf32, #tpu.memory_space<smem>>
    %c3_62 = arith.constant 3 : index
    %c2_63 = arith.constant 2 : index
    %36 = memref.load %arg3[%c3_62, %c2_63] : memref<5x3xf32, #tpu.memory_space<smem>>
    %c4_64 = arith.constant 4 : index
    %c0_65 = arith.constant 0 : index
    %37 = memref.load %arg3[%c4_64, %c0_65] : memref<5x3xf32, #tpu.memory_space<smem>>
    %c4_66 = arith.constant 4 : index
    %c1_67 = arith.constant 1 : index
    %38 = memref.load %arg3[%c4_66, %c1_67] : memref<5x3xf32, #tpu.memory_space<smem>>
    %c4_68 = arith.constant 4 : index
    %c2_69 = arith.constant 2 : index
    %39 = memref.load %arg3[%c4_68, %c2_69] : memref<5x3xf32, #tpu.memory_space<smem>>
    %c0_70 = arith.constant 0 : index
    %40 = memref.load %arg4[%c0_70] : memref<3xf32, #tpu.memory_space<smem>>
    %c1_71 = arith.constant 1 : index
    %41 = memref.load %arg4[%c1_71] : memref<3xf32, #tpu.memory_space<smem>>
    %c2_72 = arith.constant 2 : index
    %42 = memref.load %arg4[%c2_72] : memref<3xf32, #tpu.memory_space<smem>>
    %c0_i32 = arith.constant 0 : i32
    %c16_i32 = arith.constant 16 : i32
    %43 = arith.muli %c0_i32, %c16_i32 : i32
    %44 = tpu.assume_multiple %43, 16 : i32
    %c0_73 = arith.constant 0 : index
    %45 = arith.index_cast %44 : i32 to index
    %c0_74 = arith.constant 0 : index
    %46 = vector.load %arg5[%c0_73, %45, %c0_74] : memref<4x16x128xf32, #tpu.memory_space<vmem>>, vector<4x16x128xf32>
    %47 = vector.extract_strided_slice %46 {offsets = [0, 0, 0], sizes = [1, 16, 128], strides = [1, 1, 1]} : vector<4x16x128xf32> to vector<1x16x128xf32>
    %48 = vector.shape_cast %47 : vector<1x16x128xf32> to vector<16x128xf32>
    %49 = vector.broadcast %0 : f32 to vector<16x128xf32>
    %50 = arith.mulf %48, %49 : vector<16x128xf32>
    %51 = vector.broadcast %20 : f32 to vector<16x128xf32>
    %52 = arith.addf %50, %51 : vector<16x128xf32>
    %53 = vector.extract_strided_slice %46 {offsets = [1, 0, 0], sizes = [1, 16, 128], strides = [1, 1, 1]} : vector<4x16x128xf32> to vector<1x16x128xf32>
    %54 = vector.shape_cast %53 : vector<1x16x128xf32> to vector<16x128xf32>
    %55 = vector.broadcast %5 : f32 to vector<16x128xf32>
    %56 = arith.mulf %54, %55 : vector<16x128xf32>
    %57 = arith.addf %52, %56 : vector<16x128xf32>
    %58 = vector.extract_strided_slice %46 {offsets = [2, 0, 0], sizes = [1, 16, 128], strides = [1, 1, 1]} : vector<4x16x128xf32> to vector<1x16x128xf32>
    %59 = vector.shape_cast %58 : vector<1x16x128xf32> to vector<16x128xf32>
    %60 = vector.broadcast %10 : f32 to vector<16x128xf32>
    %61 = arith.mulf %59, %60 : vector<16x128xf32>
    %62 = arith.addf %57, %61 : vector<16x128xf32>
    %63 = vector.extract_strided_slice %46 {offsets = [3, 0, 0], sizes = [1, 16, 128], strides = [1, 1, 1]} : vector<4x16x128xf32> to vector<1x16x128xf32>
    %64 = vector.shape_cast %63 : vector<1x16x128xf32> to vector<16x128xf32>
    %65 = vector.broadcast %15 : f32 to vector<16x128xf32>
    %66 = arith.mulf %64, %65 : vector<16x128xf32>
    %67 = arith.addf %62, %66 : vector<16x128xf32>
    %cst = arith.constant 0.000000e+00 : f32
    %68 = vector.broadcast %cst : f32 to vector<16x128xf32>
    %69 = arith.cmpf ogt, %67, %68 : vector<16x128xf32>
    %cst_75 = arith.constant 0.000000e+00 : f32
    %70 = vector.broadcast %cst_75 : f32 to vector<16x128xf32>
    %71 = arith.minimumf %67, %70 : vector<16x128xf32>
    %72 = math.exp %71 : vector<16x128xf32>
    %cst_76 = arith.constant 1.000000e+00 : f32
    %73 = vector.broadcast %cst_76 : f32 to vector<16x128xf32>
    %74 = arith.subf %72, %73 : vector<16x128xf32>
    %75 = arith.select %69, %67, %74 : vector<16x128xi1>, vector<16x128xf32>
    %76 = vector.extract_strided_slice %46 {offsets = [0, 0, 0], sizes = [1, 16, 128], strides = [1, 1, 1]} : vector<4x16x128xf32> to vector<1x16x128xf32>
    %77 = vector.shape_cast %76 : vector<1x16x128xf32> to vector<16x128xf32>
    %78 = vector.broadcast %1 : f32 to vector<16x128xf32>
    %79 = arith.mulf %77, %78 : vector<16x128xf32>
    %80 = vector.broadcast %21 : f32 to vector<16x128xf32>
    %81 = arith.addf %79, %80 : vector<16x128xf32>
    %82 = vector.extract_strided_slice %46 {offsets = [1, 0, 0], sizes = [1, 16, 128], strides = [1, 1, 1]} : vector<4x16x128xf32> to vector<1x16x128xf32>
    %83 = vector.shape_cast %82 : vector<1x16x128xf32> to vector<16x128xf32>
    %84 = vector.broadcast %6 : f32 to vector<16x128xf32>
    %85 = arith.mulf %83, %84 : vector<16x128xf32>
    %86 = arith.addf %81, %85 : vector<16x128xf32>
    %87 = vector.extract_strided_slice %46 {offsets = [2, 0, 0], sizes = [1, 16, 128], strides = [1, 1, 1]} : vector<4x16x128xf32> to vector<1x16x128xf32>
    %88 = vector.shape_cast %87 : vector<1x16x128xf32> to vector<16x128xf32>
    %89 = vector.broadcast %11 : f32 to vector<16x128xf32>
    %90 = arith.mulf %88, %89 : vector<16x128xf32>
    %91 = arith.addf %86, %90 : vector<16x128xf32>
    %92 = vector.extract_strided_slice %46 {offsets = [3, 0, 0], sizes = [1, 16, 128], strides = [1, 1, 1]} : vector<4x16x128xf32> to vector<1x16x128xf32>
    %93 = vector.shape_cast %92 : vector<1x16x128xf32> to vector<16x128xf32>
    %94 = vector.broadcast %16 : f32 to vector<16x128xf32>
    %95 = arith.mulf %93, %94 : vector<16x128xf32>
    %96 = arith.addf %91, %95 : vector<16x128xf32>
    %cst_77 = arith.constant 0.000000e+00 : f32
    %97 = vector.broadcast %cst_77 : f32 to vector<16x128xf32>
    %98 = arith.cmpf ogt, %96, %97 : vector<16x128xf32>
    %cst_78 = arith.constant 0.000000e+00 : f32
    %99 = vector.broadcast %cst_78 : f32 to vector<16x128xf32>
    %100 = arith.minimumf %96, %99 : vector<16x128xf32>
    %101 = math.exp %100 : vector<16x128xf32>
    %cst_79 = arith.constant 1.000000e+00 : f32
    %102 = vector.broadcast %cst_79 : f32 to vector<16x128xf32>
    %103 = arith.subf %101, %102 : vector<16x128xf32>
    %104 = arith.select %98, %96, %103 : vector<16x128xi1>, vector<16x128xf32>
    %105 = vector.extract_strided_slice %46 {offsets = [0, 0, 0], sizes = [1, 16, 128], strides = [1, 1, 1]} : vector<4x16x128xf32> to vector<1x16x128xf32>
    %106 = vector.shape_cast %105 : vector<1x16x128xf32> to vector<16x128xf32>
    %107 = vector.broadcast %2 : f32 to vector<16x128xf32>
    %108 = arith.mulf %106, %107 : vector<16x128xf32>
    %109 = vector.broadcast %22 : f32 to vector<16x128xf32>
    %110 = arith.addf %108, %109 : vector<16x128xf32>
    %111 = vector.extract_strided_slice %46 {offsets = [1, 0, 0], sizes = [1, 16, 128], strides = [1, 1, 1]} : vector<4x16x128xf32> to vector<1x16x128xf32>
    %112 = vector.shape_cast %111 : vector<1x16x128xf32> to vector<16x128xf32>
    %113 = vector.broadcast %7 : f32 to vector<16x128xf32>
    %114 = arith.mulf %112, %113 : vector<16x128xf32>
    %115 = arith.addf %110, %114 : vector<16x128xf32>
    %116 = vector.extract_strided_slice %46 {offsets = [2, 0, 0], sizes = [1, 16, 128], strides = [1, 1, 1]} : vector<4x16x128xf32> to vector<1x16x128xf32>
    %117 = vector.shape_cast %116 : vector<1x16x128xf32> to vector<16x128xf32>
    %118 = vector.broadcast %12 : f32 to vector<16x128xf32>
    %119 = arith.mulf %117, %118 : vector<16x128xf32>
    %120 = arith.addf %115, %119 : vector<16x128xf32>
    %121 = vector.extract_strided_slice %46 {offsets = [3, 0, 0], sizes = [1, 16, 128], strides = [1, 1, 1]} : vector<4x16x128xf32> to vector<1x16x128xf32>
    %122 = vector.shape_cast %121 : vector<1x16x128xf32> to vector<16x128xf32>
    %123 = vector.broadcast %17 : f32 to vector<16x128xf32>
    %124 = arith.mulf %122, %123 : vector<16x128xf32>
    %125 = arith.addf %120, %124 : vector<16x128xf32>
    %cst_80 = arith.constant 0.000000e+00 : f32
    %126 = vector.broadcast %cst_80 : f32 to vector<16x128xf32>
    %127 = arith.cmpf ogt, %125, %126 : vector<16x128xf32>
    %cst_81 = arith.constant 0.000000e+00 : f32
    %128 = vector.broadcast %cst_81 : f32 to vector<16x128xf32>
    %129 = arith.minimumf %125, %128 : vector<16x128xf32>
    %130 = math.exp %129 : vector<16x128xf32>
    %cst_82 = arith.constant 1.000000e+00 : f32
    %131 = vector.broadcast %cst_82 : f32 to vector<16x128xf32>
    %132 = arith.subf %130, %131 : vector<16x128xf32>
    %133 = arith.select %127, %125, %132 : vector<16x128xi1>, vector<16x128xf32>
    %134 = vector.extract_strided_slice %46 {offsets = [0, 0, 0], sizes = [1, 16, 128], strides = [1, 1, 1]} : vector<4x16x128xf32> to vector<1x16x128xf32>
    %135 = vector.shape_cast %134 : vector<1x16x128xf32> to vector<16x128xf32>
    %136 = vector.broadcast %3 : f32 to vector<16x128xf32>
    %137 = arith.mulf %135, %136 : vector<16x128xf32>
    %138 = vector.broadcast %23 : f32 to vector<16x128xf32>
    %139 = arith.addf %137, %138 : vector<16x128xf32>
    %140 = vector.extract_strided_slice %46 {offsets = [1, 0, 0], sizes = [1, 16, 128], strides = [1, 1, 1]} : vector<4x16x128xf32> to vector<1x16x128xf32>
    %141 = vector.shape_cast %140 : vector<1x16x128xf32> to vector<16x128xf32>
    %142 = vector.broadcast %8 : f32 to vector<16x128xf32>
    %143 = arith.mulf %141, %142 : vector<16x128xf32>
    %144 = arith.addf %139, %143 : vector<16x128xf32>
    %145 = vector.extract_strided_slice %46 {offsets = [2, 0, 0], sizes = [1, 16, 128], strides = [1, 1, 1]} : vector<4x16x128xf32> to vector<1x16x128xf32>
    %146 = vector.shape_cast %145 : vector<1x16x128xf32> to vector<16x128xf32>
    %147 = vector.broadcast %13 : f32 to vector<16x128xf32>
    %148 = arith.mulf %146, %147 : vector<16x128xf32>
    %149 = arith.addf %144, %148 : vector<16x128xf32>
    %150 = vector.extract_strided_slice %46 {offsets = [3, 0, 0], sizes = [1, 16, 128], strides = [1, 1, 1]} : vector<4x16x128xf32> to vector<1x16x128xf32>
    %151 = vector.shape_cast %150 : vector<1x16x128xf32> to vector<16x128xf32>
    %152 = vector.broadcast %18 : f32 to vector<16x128xf32>
    %153 = arith.mulf %151, %152 : vector<16x128xf32>
    %154 = arith.addf %149, %153 : vector<16x128xf32>
    %cst_83 = arith.constant 0.000000e+00 : f32
    %155 = vector.broadcast %cst_83 : f32 to vector<16x128xf32>
    %156 = arith.cmpf ogt, %154, %155 : vector<16x128xf32>
    %cst_84 = arith.constant 0.000000e+00 : f32
    %157 = vector.broadcast %cst_84 : f32 to vector<16x128xf32>
    %158 = arith.minimumf %154, %157 : vector<16x128xf32>
    %159 = math.exp %158 : vector<16x128xf32>
    %cst_85 = arith.constant 1.000000e+00 : f32
    %160 = vector.broadcast %cst_85 : f32 to vector<16x128xf32>
    %161 = arith.subf %159, %160 : vector<16x128xf32>
    %162 = arith.select %156, %154, %161 : vector<16x128xi1>, vector<16x128xf32>
    %163 = vector.extract_strided_slice %46 {offsets = [0, 0, 0], sizes = [1, 16, 128], strides = [1, 1, 1]} : vector<4x16x128xf32> to vector<1x16x128xf32>
    %164 = vector.shape_cast %163 : vector<1x16x128xf32> to vector<16x128xf32>
    %165 = vector.broadcast %4 : f32 to vector<16x128xf32>
    %166 = arith.mulf %164, %165 : vector<16x128xf32>
    %167 = vector.broadcast %24 : f32 to vector<16x128xf32>
    %168 = arith.addf %166, %167 : vector<16x128xf32>
    %169 = vector.extract_strided_slice %46 {offsets = [1, 0, 0], sizes = [1, 16, 128], strides = [1, 1, 1]} : vector<4x16x128xf32> to vector<1x16x128xf32>
    %170 = vector.shape_cast %169 : vector<1x16x128xf32> to vector<16x128xf32>
    %171 = vector.broadcast %9 : f32 to vector<16x128xf32>
    %172 = arith.mulf %170, %171 : vector<16x128xf32>
    %173 = arith.addf %168, %172 : vector<16x128xf32>
    %174 = vector.extract_strided_slice %46 {offsets = [2, 0, 0], sizes = [1, 16, 128], strides = [1, 1, 1]} : vector<4x16x128xf32> to vector<1x16x128xf32>
    %175 = vector.shape_cast %174 : vector<1x16x128xf32> to vector<16x128xf32>
    %176 = vector.broadcast %14 : f32 to vector<16x128xf32>
    %177 = arith.mulf %175, %176 : vector<16x128xf32>
    %178 = arith.addf %173, %177 : vector<16x128xf32>
    %179 = vector.extract_strided_slice %46 {offsets = [3, 0, 0], sizes = [1, 16, 128], strides = [1, 1, 1]} : vector<4x16x128xf32> to vector<1x16x128xf32>
    %180 = vector.shape_cast %179 : vector<1x16x128xf32> to vector<16x128xf32>
    %181 = vector.broadcast %19 : f32 to vector<16x128xf32>
    %182 = arith.mulf %180, %181 : vector<16x128xf32>
    %183 = arith.addf %178, %182 : vector<16x128xf32>
    %cst_86 = arith.constant 0.000000e+00 : f32
    %184 = vector.broadcast %cst_86 : f32 to vector<16x128xf32>
    %185 = arith.cmpf ogt, %183, %184 : vector<16x128xf32>
    %cst_87 = arith.constant 0.000000e+00 : f32
    %186 = vector.broadcast %cst_87 : f32 to vector<16x128xf32>
    %187 = arith.minimumf %183, %186 : vector<16x128xf32>
    %188 = math.exp %187 : vector<16x128xf32>
    %cst_88 = arith.constant 1.000000e+00 : f32
    %189 = vector.broadcast %cst_88 : f32 to vector<16x128xf32>
    %190 = arith.subf %188, %189 : vector<16x128xf32>
    %191 = arith.select %185, %183, %190 : vector<16x128xi1>, vector<16x128xf32>
    %192 = vector.broadcast %25 : f32 to vector<16x128xf32>
    %193 = arith.mulf %75, %192 : vector<16x128xf32>
    %194 = vector.broadcast %40 : f32 to vector<16x128xf32>
    %195 = arith.addf %193, %194 : vector<16x128xf32>
    %196 = vector.broadcast %28 : f32 to vector<16x128xf32>
    %197 = arith.mulf %104, %196 : vector<16x128xf32>
    %198 = arith.addf %195, %197 : vector<16x128xf32>
    %199 = vector.broadcast %31 : f32 to vector<16x128xf32>
    %200 = arith.mulf %133, %199 : vector<16x128xf32>
    %201 = arith.addf %198, %200 : vector<16x128xf32>
    %202 = vector.broadcast %34 : f32 to vector<16x128xf32>
    %203 = arith.mulf %162, %202 : vector<16x128xf32>
    %204 = arith.addf %201, %203 : vector<16x128xf32>
    %205 = vector.broadcast %37 : f32 to vector<16x128xf32>
    %206 = arith.mulf %191, %205 : vector<16x128xf32>
    %207 = arith.addf %204, %206 : vector<16x128xf32>
    %208 = vector.broadcast %26 : f32 to vector<16x128xf32>
    %209 = arith.mulf %75, %208 : vector<16x128xf32>
    %210 = vector.broadcast %41 : f32 to vector<16x128xf32>
    %211 = arith.addf %209, %210 : vector<16x128xf32>
    %212 = vector.broadcast %29 : f32 to vector<16x128xf32>
    %213 = arith.mulf %104, %212 : vector<16x128xf32>
    %214 = arith.addf %211, %213 : vector<16x128xf32>
    %215 = vector.broadcast %32 : f32 to vector<16x128xf32>
    %216 = arith.mulf %133, %215 : vector<16x128xf32>
    %217 = arith.addf %214, %216 : vector<16x128xf32>
    %218 = vector.broadcast %35 : f32 to vector<16x128xf32>
    %219 = arith.mulf %162, %218 : vector<16x128xf32>
    %220 = arith.addf %217, %219 : vector<16x128xf32>
    %221 = vector.broadcast %38 : f32 to vector<16x128xf32>
    %222 = arith.mulf %191, %221 : vector<16x128xf32>
    %223 = arith.addf %220, %222 : vector<16x128xf32>
    %224 = vector.broadcast %27 : f32 to vector<16x128xf32>
    %225 = arith.mulf %75, %224 : vector<16x128xf32>
    %226 = vector.broadcast %42 : f32 to vector<16x128xf32>
    %227 = arith.addf %225, %226 : vector<16x128xf32>
    %228 = vector.broadcast %30 : f32 to vector<16x128xf32>
    %229 = arith.mulf %104, %228 : vector<16x128xf32>
    %230 = arith.addf %227, %229 : vector<16x128xf32>
    %231 = vector.broadcast %33 : f32 to vector<16x128xf32>
    %232 = arith.mulf %133, %231 : vector<16x128xf32>
    %233 = arith.addf %230, %232 : vector<16x128xf32>
    %234 = vector.broadcast %36 : f32 to vector<16x128xf32>
    %235 = arith.mulf %162, %234 : vector<16x128xf32>
    %236 = arith.addf %233, %235 : vector<16x128xf32>
    %237 = vector.broadcast %39 : f32 to vector<16x128xf32>
    %238 = arith.mulf %191, %237 : vector<16x128xf32>
    %239 = arith.addf %236, %238 : vector<16x128xf32>
    %240 = arith.maximumf %207, %223 : vector<16x128xf32>
    %241 = arith.maximumf %240, %239 : vector<16x128xf32>
    %242 = arith.subf %207, %241 : vector<16x128xf32>
    %243 = math.exp %242 : vector<16x128xf32>
    %244 = arith.subf %223, %241 : vector<16x128xf32>
    %245 = math.exp %244 : vector<16x128xf32>
    %246 = arith.subf %239, %241 : vector<16x128xf32>
    %247 = math.exp %246 : vector<16x128xf32>
    %248 = arith.addf %243, %245 : vector<16x128xf32>
    %249 = arith.addf %248, %247 : vector<16x128xf32>
    %250 = tpu.reciprocal %249 {approx = true} : vector<16x128xf32> -> vector<16x128xf32>
    %251 = arith.mulf %249, %250 : vector<16x128xf32>
    %cst_89 = arith.constant 2.000000e+00 : f32
    %252 = vector.broadcast %cst_89 : f32 to vector<16x128xf32>
    %253 = arith.subf %252, %251 : vector<16x128xf32>
    %254 = arith.mulf %250, %253 : vector<16x128xf32>
    %255 = arith.index_cast %44 : i32 to index
    %c0_90 = arith.constant 0 : index
    %256 = vector.load %arg6[%255, %c0_90] : memref<16x128xi32, #tpu.memory_space<vmem>>, vector<16x128xi32>
    %c0_i32_91 = arith.constant 0 : i32
    %257 = vector.broadcast %c0_i32_91 : i32 to vector<16x128xi32>
    %258 = arith.cmpi eq, %256, %257 : vector<16x128xi32>
    %c1_i32 = arith.constant 1 : i32
    %259 = vector.broadcast %c1_i32 : i32 to vector<16x128xi32>
    %260 = arith.cmpi eq, %256, %259 : vector<16x128xi32>
    %261 = arith.select %260, %245, %247 : vector<16x128xi1>, vector<16x128xf32>
    %262 = arith.select %258, %243, %261 : vector<16x128xi1>, vector<16x128xf32>
    %263 = arith.mulf %262, %254 : vector<16x128xf32>
    %264 = arith.index_cast %44 : i32 to index
    %c0_92 = arith.constant 0 : index
    %265 = vector.load %arg7[%264, %c0_92] : memref<16x128xf32, #tpu.memory_space<vmem>>, vector<16x128xf32>
    tpu.vector_store %arg7[%264, %c0_92], %263 {strides = array<i32>} : memref<16x128xf32, #tpu.memory_space<vmem>>, vector<16x128xf32>,
    %c1_i32_93 = arith.constant 1 : i32
    return
  }
  func.func @transform_0(%arg0: i32) -> (i32, i32) {
    %c0_i32 = arith.constant 0 : i32
    %c0_i32_0 = arith.constant 0 : i32
    %c0_i32_1 = arith.constant 0 : i32
    return %c0_i32, %c0_i32_0 : i32, i32
  }
  func.func @transform_1(%arg0: i32) -> i32 {
    %c0_i32 = arith.constant 0 : i32
    %c0_i32_0 = arith.constant 0 : i32
    return %c0_i32 : i32
  }
  func.func @transform_2(%arg0: i32) -> (i32, i32) {
    %c0_i32 = arith.constant 0 : i32
    %c0_i32_0 = arith.constant 0 : i32
    %c0_i32_1 = arith.constant 0 : i32
    return %c0_i32, %c0_i32_0 : i32, i32
  }
  func.func @transform_3(%arg0: i32) -> i32 {
    %c0_i32 = arith.constant 0 : i32
    %c0_i32_0 = arith.constant 0 : i32
    return %c0_i32 : i32
  }
  func.func @transform_4(%arg0: i32) -> (i32, i32, i32) {
    %c0_i32 = arith.constant 0 : i32
    %c0_i32_0 = arith.constant 0 : i32
    %c0_i32_1 = arith.constant 0 : i32
    return %c0_i32, %arg0, %c0_i32_0 : i32, i32, i32
  }
  func.func @transform_5(%arg0: i32) -> (i32, i32) {
    %c0_i32 = arith.constant 0 : i32
    %c0_i32_0 = arith.constant 0 : i32
    return %arg0, %c0_i32 : i32, i32
  }
  func.func @transform_6(%arg0: i32) -> (i32, i32) {
    %c0_i32 = arith.constant 0 : i32
    %c0_i32_0 = arith.constant 0 : i32
    return %arg0, %c0_i32 : i32, i32
  }
}

</mosaic_0001>

<llo_original>
// kernel: tpu_custom_call.1
$region0: #{tpu_custom_call.1}
  #allocation0 [shape = 'u32[]', space=smem, size = 0x4, offset = 0x4, fixed_abs, tag = 'smem constant byte address 0x4 - core index']
  #allocation1 [shape = 'u32[144,128]{1,0:T(1,128)}', space=vmem, size = 0x12000, scoped, tag = 'internal scratch']
  %s0 = inlined_call_operand.vmem [shape: f32[4,5], index: 0, kind: input, shape index: {}]
  %s1 = inlined_call_operand.vmem [shape: f32[5], index: 1, kind: input, shape index: {}]
  %s2 = inlined_call_operand.vmem [shape: f32[5,3], index: 2, kind: input, shape index: {}]
  %s3 = inlined_call_operand.hbm [shape: f32[3], index: 3, kind: input, shape index: {}]
  %s4 = inlined_call_operand.hbm [shape: f32[4,16,128], index: 4, kind: input, shape index: {}]
  %s5 = inlined_call_operand.vmem [shape: s32[16,128], index: 5, kind: input, shape index: {}]
  %s6 = inlined_call_operand.hbm [shape: f32[16,128], index: 6, kind: output, shape index: {}]
  %s7 = sld [smem:[#allocation0]]
  $region54: #{tpu_custom_call.1} parent=0
    _
  %s9 = ssub.s32 1, %s7
  %s10 = scalar_select 0, %s9, %s7
  $region1: #{tpu_custom_call.1} parent=0
    #allocation2 [shape = 'u8[2048]{0}', space=smem, size = 0x800, scoped, tag = 'input window, operand 0, single buffered']
    #allocation3 [shape = 's32[1]{0}', space=sflag, size = 0x4, scoped, tag = 'scoped memory for tpu_custom_call.1']
    #allocation4 [shape = 's32[1]{0}', space=sflag, size = 0x4, scoped, tag = 'scoped memory for tpu_custom_call.1']
    #allocation5 [shape = 's32[1]{0}', space=sflag, size = 0x4, scoped, tag = 'scoped memory for tpu_custom_call.1']
    #allocation6 [shape = 's32[1]{0}', space=sflag, size = 0x4, scoped, tag = 'scoped memory for tpu_custom_call.1']
    #allocation7 [shape = 'u8[512]{0}', space=smem, size = 0x200, scoped, tag = 'input window, operand 1, single buffered']
    #allocation8 [shape = 's32[1]{0}', space=sflag, size = 0x4, scoped, tag = 'scoped memory for tpu_custom_call.1']
    #allocation9 [shape = 'u8[4096]{0}', space=smem, size = 0x1000, scoped, tag = 'input window, operand 2, single buffered']
    #allocation10 [shape = 'u8[512]{0}', space=smem, size = 0x200, scoped, tag = 'input window, operand 3, single buffered']
    #allocation11 [shape = 'u8[32768]{0}', space=vmem, size = 0x8000, scoped, tag = 'input window, operand 4, single buffered']
    #allocation12 [shape = 'u8[8192]{0}', space=vmem, size = 0x2000, scoped, tag = 'output window, operand 0, single buffered']
    %11 = vsyncpa [#allocation6], 0
    %12 = vsyncpa [#allocation8], 0
    %13 = vsyncpa [#allocation5], 0
    %14 = vsyncpa [#allocation3], 0
    %15 = vsyncpa [#allocation4], 0
    // Predicated region
    $region2: #{tpu_custom_call.1} parent=1 // pred_check
      _
    $region3: #{tpu_custom_call.1} parent=1 // pred_check_branch
      %17 = sbr.rel (0) target = $region5
    $region4: #{tpu_custom_call.1} parent=1 // pred_region
      %s19 = ssub.s32 64, 64
      %20 = vsyncadd [#allocation6], %s19
      %s22 = sshll.u32 %s0, 4
      %s23 = int_to_ptr.vmem [resolvable:$true] %s22
      %25 = dma.vmem_to_smem %s23, 64, [#allocation2], [#allocation6]
    $region5: #{tpu_custom_call.1} parent=1 // pred_fallthru
      _
    // Predicated region
    $region6: #{tpu_custom_call.1} parent=1 // pred_check
      _
    $region7: #{tpu_custom_call.1} parent=1 // pred_check_branch
      %27 = sbr.rel (0) target = $region9
    $region8: #{tpu_custom_call.1} parent=1 // pred_region
      %s29 = ssub.s32 16, 16
      %30 = vsyncadd [#allocation8], %s29
      %s32 = sshll.u32 %s1, 4
      %s33 = int_to_ptr.vmem [resolvable:$true] %s32
      %35 = dma.vmem_to_smem %s33, 16, [#allocation7], [#allocation8]
    $region9: #{tpu_custom_call.1} parent=1 // pred_fallthru
      _
    // Predicated region
    $region10: #{tpu_custom_call.1} parent=1 // pred_check
      _
    $region11: #{tpu_custom_call.1} parent=1 // pred_check_branch
      %37 = sbr.rel (0) target = $region13
    $region12: #{tpu_custom_call.1} parent=1 // pred_region
      %s39 = ssub.s32 128, 128
      %40 = vsyncadd [#allocation8], %s39
      %s42 = sshll.u32 %s2, 4
      %s43 = int_to_ptr.vmem [resolvable:$true] %s42
      %45 = dma.vmem_to_smem %s43, 128, [#allocation9], [#allocation8]
    $region13: #{tpu_custom_call.1} parent=1 // pred_fallthru
      _
    // Predicated region
    $region14: #{tpu_custom_call.1} parent=1 // pred_check
      _
    $region15: #{tpu_custom_call.1} parent=1 // pred_check_branch
      %47 = sbr.rel (0) target = $region17
    $region16: #{tpu_custom_call.1} parent=1 // pred_region
      %s49 = ssub.s32 16, 16
      %50 = vsyncadd [#allocation5], %s49
      %53 = dma.hbm_to_smem %s3, 16, [#allocation10], [#allocation5]
    $region17: #{tpu_custom_call.1} parent=1 // pred_fallthru
      _
    // Predicated region
    $region18: #{tpu_custom_call.1} parent=1 // pred_check
      _
    $region19: #{tpu_custom_call.1} parent=1 // pred_check_branch
      %55 = sbr.rel (0) target = $region21
    $region20: #{tpu_custom_call.1} parent=1 // pred_region
      %s57 = ssub.s32 1024, 1024
      %58 = vsyncadd [#allocation3], %s57
      %s59 = sshll.u32 [#allocation11], 4
      %s60 = int_to_ptr.vmem [resolvable:$true] %s59
      %65 = dma.hbm_to_vmem [thread:$0]  %s4, 1024, %s60, [#allocation3], 128, 128, 8
    $region21: #{tpu_custom_call.1} parent=1 // pred_fallthru
      _
    // Predicated region
    $region22: #{tpu_custom_call.1} parent=1 // pred_check
      _
    $region23: #{tpu_custom_call.1} parent=1 // pred_check_branch
      %67 = sbr.rel (0) target = $region25
    $region24: #{tpu_custom_call.1} parent=1 // pred_region
      _
    $region25: #{tpu_custom_call.1} parent=1 // pred_fallthru
      _
    // Predicated region
    $region26: #{tpu_custom_call.1} parent=1 // pred_check
      _
    $region27: #{tpu_custom_call.1} parent=1 // pred_check_branch
      %69 = sbr.rel (0) target = $region29
    $region28: #{tpu_custom_call.1} parent=1 // pred_region
      %70 = dma.done [#allocation6], 64
    $region29: #{tpu_custom_call.1} parent=1 // pred_fallthru
      _
    // Predicated region
    $region30: #{tpu_custom_call.1} parent=1 // pred_check
      _
    $region31: #{tpu_custom_call.1} parent=1 // pred_check_branch
      %72 = sbr.rel (0) target = $region33
    $region32: #{tpu_custom_call.1} parent=1 // pred_region
      %73 = dma.done [#allocation8], 16
    $region33: #{tpu_custom_call.1} parent=1 // pred_fallthru
      _
    // Predicated region
    $region34: #{tpu_custom_call.1} parent=1 // pred_check
      _
    $region35: #{tpu_custom_call.1} parent=1 // pred_check_branch
      %75 = sbr.rel (0) target = $region37
    $region36: #{tpu_custom_call.1} parent=1 // pred_region
      %76 = dma.done [#allocation8], 128
    $region37: #{tpu_custom_call.1} parent=1 // pred_fallthru
      _
    // Predicated region
    $region38: #{tpu_custom_call.1} parent=1 // pred_check
      _
    $region39: #{tpu_custom_call.1} parent=1 // pred_check_branch
      %78 = sbr.rel (0) target = $region41
    $region40: #{tpu_custom_call.1} parent=1 // pred_region
      %79 = dma.done [#allocation5], 16
    $region41: #{tpu_custom_call.1} parent=1 // pred_fallthru
      _
    // Predicated region
    $region42: #{tpu_custom_call.1} parent=1 // pred_check
      _
    $region43: #{tpu_custom_call.1} parent=1 // pred_check_branch
      %81 = sbr.rel (0) target = $region45
    $region44: #{tpu_custom_call.1} parent=1 // pred_region
      %82 = dma.done [#allocation3], 1024
    $region45: #{tpu_custom_call.1} parent=1 // pred_fallthru
      _
    %83 = sfence
    %s84 = sld [smem:[#allocation2]]
    %s85 = sld [smem:[#allocation2 + $0x1]]
    %s86 = sld [smem:[#allocation2 + $0x2]]
    %s87 = sld [smem:[#allocation2 + $0x3]]
    %s88 = sld [smem:[#allocation2 + $0x4]]
    %s89 = sld [smem:[#allocation2 + $0x80]]
    %s90 = sld [smem:[#allocation2 + $0x81]]
    %s91 = sld [smem:[#allocation2 + $0x82]]
    %s92 = sld [smem:[#allocation2 + $0x83]]
    %s93 = sld [smem:[#allocation2 + $0x84]]
    %s94 = sld [smem:[#allocation2 + $0x100]]
    %s95 = sld [smem:[#allocation2 + $0x101]]
    %s96 = sld [smem:[#allocation2 + $0x102]]
    %s97 = sld [smem:[#allocation2 + $0x103]]
    %s98 = sld [smem:[#allocation2 + $0x104]]
    %s99 = sld [smem:[#allocation2 + $0x180]]
    %s100 = sld [smem:[#allocation2 + $0x181]]
    %s101 = sld [smem:[#allocation2 + $0x182]]
    %s102 = sld [smem:[#allocation2 + $0x183]]
    %s103 = sld [smem:[#allocation2 + $0x184]]
    %s104 = sld [smem:[#allocation7]]
    %s105 = sld [smem:[#allocation7 + $0x1]]
    %s106 = sld [smem:[#allocation7 + $0x2]]
    %s107 = sld [smem:[#allocation7 + $0x3]]
    %s108 = sld [smem:[#allocation7 + $0x4]]
    %s109 = sld [smem:[#allocation9]]
    %s110 = sld [smem:[#allocation9 + $0x1]]
    %s111 = sld [smem:[#allocation9 + $0x2]]
    %s112 = sld [smem:[#allocation9 + $0x80]]
    %s113 = sld [smem:[#allocation9 + $0x81]]
    %s114 = sld [smem:[#allocation9 + $0x82]]
    %s115 = sld [smem:[#allocation9 + $0x100]]
    %s116 = sld [smem:[#allocation9 + $0x101]]
    %s117 = sld [smem:[#allocation9 + $0x102]]
    %s118 = sld [smem:[#allocation9 + $0x180]]
    %s119 = sld [smem:[#allocation9 + $0x181]]
    %s120 = sld [smem:[#allocation9 + $0x182]]
    %s121 = sld [smem:[#allocation9 + $0x200]]
    %s122 = sld [smem:[#allocation9 + $0x201]]
    %s123 = sld [smem:[#allocation9 + $0x202]]
    %s124 = sld [smem:[#allocation10]]
    %s125 = sld [smem:[#allocation10 + $0x1]]
    %s126 = sld [smem:[#allocation10 + $0x2]]
    %v127 = vld [vmem:[#allocation11] sm:$0xff]
    %v128 = vld [vmem:[#allocation11 + $0x8] sm:$0xff]
    %v129 = vld [vmem:[#allocation11 + $0x10] sm:$0xff]
    %v130 = vld [vmem:[#allocation11 + $0x18] sm:$0xff]
    %v131 = vld [vmem:[#allocation11 + $0x20] sm:$0xff]
    %v132 = vld [vmem:[#allocation11 + $0x28] sm:$0xff]
    %v133 = vld [vmem:[#allocation11 + $0x30] sm:$0xff]
    %v134 = vld [vmem:[#allocation11 + $0x38] sm:$0xff]
    %v135 = vstv %s84
    %v136 = vmul.f32 %v127, %v135
    %v137 = vmul.f32 %v128, %v135
    %v138 = vstv %s104
    %v139 = vadd.f32 %v136, %v138
    %v140 = vadd.f32 %v137, %v138
    %v141 = vstv %s89
    %v142 = vmul.f32 %v129, %v141
    %v143 = vmul.f32 %v130, %v141
    %v144 = vadd.f32 %v139, %v142
    %v145 = vadd.f32 %v140, %v143
    %v146 = vstv %s94
    %v147 = vmul.f32 %v131, %v146
    %v148 = vmul.f32 %v132, %v146
    %v149 = vadd.f32 %v144, %v147
    %v150 = vadd.f32 %v145, %v148
    %v151 = vstv %s99
    %v152 = vmul.f32 %v133, %v151
    %v153 = vmul.f32 %v134, %v151
    %v154 = vadd.f32 %v149, %v152
    %v155 = vadd.f32 %v150, %v153
    %vm156 = vcmp.gt.f32.partialorder %v154, 0.0
    %vm157 = vcmp.gt.f32.partialorder %v155, 0.0
    %v158 = vmin.f32 %v154, 0.0
    %v159 = vmin.f32 %v155, 0.0
    %v160 = vmul.f32 %v158, 1.442695
    %v161 = vpow.pop %v160
    %v162 = vmul.f32 %v159, 1.442695
    %v163 = vpow.pop %v162
    %v164 = vsub.f32 %v161, 1.0
    %v165 = vsub.f32 %v163, 1.0
    %v166 = vsel %vm156, %v154, %v164
    %v167 = vsel %vm157, %v155, %v165
    %v168 = vstv %s85
    %v169 = vmul.f32 %v127, %v168
    %v170 = vmul.f32 %v128, %v168
    %v171 = vstv %s105
    %v172 = vadd.f32 %v169, %v171
    %v173 = vadd.f32 %v170, %v171
    %v174 = vstv %s90
    %v175 = vmul.f32 %v129, %v174
    %v176 = vmul.f32 %v130, %v174
    %v177 = vadd.f32 %v172, %v175
    %v178 = vadd.f32 %v173, %v176
    %v179 = vstv %s95
    %v180 = vmul.f32 %v131, %v179
    %v181 = vmul.f32 %v132, %v179
    %v182 = vadd.f32 %v177, %v180
    %v183 = vadd.f32 %v178, %v181
    %v184 = vstv %s100
    %v185 = vmul.f32 %v133, %v184
    %v186 = vmul.f32 %v134, %v184
    %v187 = vadd.f32 %v182, %v185
    %v188 = vadd.f32 %v183, %v186
    %vm189 = vcmp.gt.f32.partialorder %v187, 0.0
    %vm190 = vcmp.gt.f32.partialorder %v188, 0.0
    %v191 = vmin.f32 %v187, 0.0
    %v192 = vmin.f32 %v188, 0.0
    %v193 = vmul.f32 %v191, 1.442695
    %v194 = vpow.pop %v193
    %v195 = vmul.f32 %v192, 1.442695
    %v196 = vpow.pop %v195
    %v197 = vsub.f32 %v194, 1.0
    %v198 = vsub.f32 %v196, 1.0
    %v199 = vsel %vm189, %v187, %v197
    %v200 = vsel %vm190, %v188, %v198
    %v201 = vstv %s86
    %v202 = vmul.f32 %v127, %v201
    %v203 = vmul.f32 %v128, %v201
    %v204 = vstv %s106
    %v205 = vadd.f32 %v202, %v204
    %v206 = vadd.f32 %v203, %v204
    %v207 = vstv %s91
    %v208 = vmul.f32 %v129, %v207
    %v209 = vmul.f32 %v130, %v207
    %v210 = vadd.f32 %v205, %v208
    %v211 = vadd.f32 %v206, %v209
    %v212 = vstv %s96
    %v213 = vmul.f32 %v131, %v212
    %v214 = vmul.f32 %v132, %v212
    %v215 = vadd.f32 %v210, %v213
    %v216 = vadd.f32 %v211, %v214
    %v217 = vstv %s101
    %v218 = vmul.f32 %v133, %v217
    %v219 = vmul.f32 %v134, %v217
    %v220 = vadd.f32 %v215, %v218
    %v221 = vadd.f32 %v216, %v219
    %vm222 = vcmp.gt.f32.partialorder %v220, 0.0
    %vm223 = vcmp.gt.f32.partialorder %v221, 0.0
    %v224 = vmin.f32 %v220, 0.0
    %v225 = vmin.f32 %v221, 0.0
    %v226 = vmul.f32 %v224, 1.442695
    %v227 = vpow.pop %v226
    %v228 = vmul.f32 %v225, 1.442695
    %v229 = vpow.pop %v228
    %v230 = vsub.f32 %v227, 1.0
    %v231 = vsub.f32 %v229, 1.0
    %v232 = vsel %vm222, %v220, %v230
    %v233 = vsel %vm223, %v221, %v231
    %v234 = vstv %s87
    %v235 = vmul.f32 %v127, %v234
    %v236 = vmul.f32 %v128, %v234
    %v237 = vstv %s107
    %v238 = vadd.f32 %v235, %v237
    %v239 = vadd.f32 %v236, %v237
    %v240 = vstv %s92
    %v241 = vmul.f32 %v129, %v240
    %v242 = vmul.f32 %v130, %v240
    %v243 = vadd.f32 %v238, %v241
    %v244 = vadd.f32 %v239, %v242
    %v245 = vstv %s97
    %v246 = vmul.f32 %v131, %v245
    %v247 = vmul.f32 %v132, %v245
    %v248 = vadd.f32 %v243, %v246
    %v249 = vadd.f32 %v244, %v247
    %v250 = vstv %s102
    %v251 = vmul.f32 %v133, %v250
    %v252 = vmul.f32 %v134, %v250
    %v253 = vadd.f32 %v248, %v251
    %v254 = vadd.f32 %v249, %v252
    %vm255 = vcmp.gt.f32.partialorder %v253, 0.0
    %vm256 = vcmp.gt.f32.partialorder %v254, 0.0
    %v257 = vmin.f32 %v253, 0.0
    %v258 = vmin.f32 %v254, 0.0
    %v259 = vmul.f32 %v257, 1.442695
    %v260 = vpow.pop %v259
    %v261 = vmul.f32 %v258, 1.442695
    %v262 = vpow.pop %v261
    %v263 = vsub.f32 %v260, 1.0
    %v264 = vsub.f32 %v262, 1.0
    %v265 = vsel %vm255, %v253, %v263
    %v266 = vsel %vm256, %v254, %v264
    %v267 = vstv %s88
    %v268 = vmul.f32 %v127, %v267
    %v269 = vmul.f32 %v128, %v267
    %v270 = vstv %s108
    %v271 = vadd.f32 %v268, %v270
    %v272 = vadd.f32 %v269, %v270
    %v273 = vstv %s93
    %v274 = vmul.f32 %v129, %v273
    %v275 = vmul.f32 %v130, %v273
    %v276 = vadd.f32 %v271, %v274
    %v277 = vadd.f32 %v272, %v275
    %v278 = vstv %s98
    %v279 = vmul.f32 %v131, %v278
    %v280 = vmul.f32 %v132, %v278
    %v281 = vadd.f32 %v276, %v279
    %v282 = vadd.f32 %v277, %v280
    %v283 = vstv %s103
    %v284 = vmul.f32 %v133, %v283
    %v285 = vmul.f32 %v134, %v283
    %v286 = vadd.f32 %v281, %v284
    %v287 = vadd.f32 %v282, %v285
    %vm288 = vcmp.gt.f32.partialorder %v286, 0.0
    %vm289 = vcmp.gt.f32.partialorder %v287, 0.0
    %v290 = vmin.f32 %v286, 0.0
    %v291 = vmin.f32 %v287, 0.0
    %v292 = vmul.f32 %v290, 1.442695
    %v293 = vpow.pop %v292
    %v294 = vmul.f32 %v291, 1.442695
    %v295 = vpow.pop %v294
    %v296 = vsub.f32 %v293, 1.0
    %v297 = vsub.f32 %v295, 1.0
    %v298 = vsel %vm288, %v286, %v296
    %v299 = vsel %vm289, %v287, %v297
    %v300 = vstv %s109
    %v301 = vmul.f32 %v166, %v300
    %v302 = vmul.f32 %v167, %v300
    %v303 = vstv %s124
    %v304 = vadd.f32 %v301, %v303
    %v305 = vadd.f32 %v302, %v303
    %v306 = vstv %s112
    %v307 = vmul.f32 %v199, %v306
    %v308 = vmul.f32 %v200, %v306
    %v309 = vadd.f32 %v304, %v307
    %v310 = vadd.f32 %v305, %v308
    %v311 = vstv %s115
    %v312 = vmul.f32 %v232, %v311
    %v313 = vmul.f32 %v233, %v311
    %v314 = vadd.f32 %v309, %v312
    %v315 = vadd.f32 %v310, %v313
    %v316 = vstv %s118
    %v317 = vmul.f32 %v265, %v316
    %v318 = vmul.f32 %v266, %v316
    %v319 = vadd.f32 %v314, %v317
    %v320 = vadd.f32 %v315, %v318
    %v321 = vstv %s121
    %v322 = vmul.f32 %v298, %v321
    %v323 = vmul.f32 %v299, %v321
    %v324 = vadd.f32 %v319, %v322
    %v325 = vadd.f32 %v320, %v323
    %v326 = vstv %s110
    %v327 = vmul.f32 %v166, %v326
    %v328 = vmul.f32 %v167, %v326
    %v329 = vstv %s125
    %v330 = vadd.f32 %v327, %v329
    %v331 = vadd.f32 %v328, %v329
    %v332 = vstv %s113
    %v333 = vmul.f32 %v199, %v332
    %v334 = vmul.f32 %v200, %v332
    %v335 = vadd.f32 %v330, %v333
    %v336 = vadd.f32 %v331, %v334
    %v337 = vstv %s116
    %v338 = vmul.f32 %v232, %v337
    %v339 = vmul.f32 %v233, %v337
    %v340 = vadd.f32 %v335, %v338
    %v341 = vadd.f32 %v336, %v339
    %v342 = vstv %s119
    %v343 = vmul.f32 %v265, %v342
    %v344 = vmul.f32 %v266, %v342
    %v345 = vadd.f32 %v340, %v343
    %v346 = vadd.f32 %v341, %v344
    %v347 = vstv %s122
    %v348 = vmul.f32 %v298, %v347
    %v349 = vmul.f32 %v299, %v347
    %v350 = vadd.f32 %v345, %v348
    %v351 = vadd.f32 %v346, %v349
    %v352 = vstv %s111
    %v353 = vmul.f32 %v166, %v352
    %v354 = vmul.f32 %v167, %v352
    %v355 = vstv %s126
    %v356 = vadd.f32 %v353, %v355
    %v357 = vadd.f32 %v354, %v355
    %v358 = vstv %s114
    %v359 = vmul.f32 %v199, %v358
    %v360 = vmul.f32 %v200, %v358
    %v361 = vadd.f32 %v356, %v359
    %v362 = vadd.f32 %v357, %v360
    %v363 = vstv %s117
    %v364 = vmul.f32 %v232, %v363
    %v365 = vmul.f32 %v233, %v363
    %v366 = vadd.f32 %v361, %v364
    %v367 = vadd.f32 %v362, %v365
    %v368 = vstv %s120
    %v369 = vmul.f32 %v265, %v368
    %v370 = vmul.f32 %v266, %v368
    %v371 = vadd.f32 %v366, %v369
    %v372 = vadd.f32 %v367, %v370
    %v373 = vstv %s123
    %v374 = vmul.f32 %v298, %v373
    %v375 = vmul.f32 %v299, %v373
    %v376 = vadd.f32 %v371, %v374
    %v377 = vadd.f32 %v372, %v375
    %v378 = vmax.f32 %v324, %v350
    %v379 = vmax.f32 %v325, %v351
    %v380 = vmax.f32 %v378, %v376
    %v381 = vmax.f32 %v379, %v377
    %v382 = vsub.f32 %v324, %v380
    %v383 = vsub.f32 %v325, %v381
    %v384 = vmul.f32 %v382, 1.442695
    %v385 = vpow.pop %v384
    %v386 = vmul.f32 %v383, 1.442695
    %v387 = vpow.pop %v386
    %v388 = vsub.f32 %v350, %v380
    %v389 = vsub.f32 %v351, %v381
    %v390 = vmul.f32 %v388, 1.442695
    %v391 = vpow.pop %v390
    %v392 = vmul.f32 %v389, 1.442695
    %v393 = vpow.pop %v392
    %v394 = vsub.f32 %v376, %v380
    %v395 = vsub.f32 %v377, %v381
    %v396 = vmul.f32 %v394, 1.442695
    %v397 = vpow.pop %v396
    %v398 = vmul.f32 %v395, 1.442695
    %v399 = vpow.pop %v398
    %v400 = vadd.f32 %v385, %v391
    %v401 = vadd.f32 %v387, %v393
    %v402 = vadd.f32 %v400, %v397
    %v403 = vadd.f32 %v401, %v399
    %v404 = vrcp.pop %v402
    %v405 = vrcp.pop %v403
    %v406 = vmul.f32 %v402, %v404
    %v407 = vmul.f32 %v403, %v405
    %v408 = vsub.f32 2.0, %v406
    %v409 = vsub.f32 2.0, %v407
    %v410 = vmul.f32 %v404, %v408
    %v411 = vmul.f32 %v405, %v409
    %v412 = vld [vmem:[%s5] sm:$0xff]
    %v413 = vld [vmem:[%s5 + $0x8] sm:$0xff]
    %vm414 = vcmp.eq.s32.totalorder %v412, 0
    %vm415 = vcmp.eq.s32.totalorder %v413, 0
    %vm416 = vcmp.eq.s32.totalorder %v412, 1
    %vm417 = vcmp.eq.s32.totalorder %v413, 1
    %v418 = vsel %vm416, %v391, %v397
    %v419 = vsel %vm417, %v393, %v399
    %v420 = vsel %vm414, %v385, %v418
    %v421 = vsel %vm415, %v387, %v419
    %v422 = vmul.f32 %v420, %v410
    %v423 = vmul.f32 %v421, %v411
    %424 = vst [vmem:[#allocation12] sm:$0xff] %v422
    %425 = vst [vmem:[#allocation12 + $0x8] sm:$0xff] %v423
    // Predicated region
    $region46: #{tpu_custom_call.1} parent=1 // pred_check
      _
    $region47: #{tpu_custom_call.1} parent=1 // pred_check_branch
      %427 = sbr.rel (0) target = $region49
    $region48: #{tpu_custom_call.1} parent=1 // pred_region
      %s429 = ssub.s32 256, 256
      %430 = vsyncadd [#allocation4], %s429
      %s431 = sshll.u32 [#allocation12], 4
      %s432 = int_to_ptr.vmem [resolvable:$true] %s431
      %437 = dma.vmem_to_hbm [thread:$0]  %s432, 256, %s6, [#allocation4], 128, 128, 8
    $region49: #{tpu_custom_call.1} parent=1 // pred_fallthru
      _
    // Predicated region
    $region50: #{tpu_custom_call.1} parent=1 // pred_check
      _
    $region51: #{tpu_custom_call.1} parent=1 // pred_check_branch
      %439 = sbr.rel (0) target = $region53
    $region52: #{tpu_custom_call.1} parent=1 // pred_region
      %440 = dma.done [#allocation4], 256
    $region53: #{tpu_custom_call.1} parent=1 // pred_fallthru
      _
    %441 = vsyncpa [#allocation3], 1
    %442 = vsyncpa [#allocation4], 1
    %443 = vsyncpa [#allocation5], 1
    %444 = vsyncpa [#allocation6], 1
    %445 = vsyncpa [#allocation8], 1

</llo_original>
